<compile_context>
chip_gen: v7x
topology: tpu7x:2x2x1
jax: 0.10.0
libtpu: 0.0.40
codegen_flags: <defaults>
</compile_context>

<pallas_src>
import jax
import jax.numpy as jnp
from jax.experimental import pallas as pl
from jax.experimental.pallas import tpu as pltpu

_LANES = 128  # one vreg lane width; everything in this kernel is <= 1 lane-tile


def _make_conv3d_kernel(n, c_in, oc, d, h, w, kd, kh, kw):
    """Builds a fully fused Conv3d (stride 1, VALID) kernel for tiny static shapes.

    Kernel ref layout:
      x_ref: (N*C, 128)            f32 VMEM  (row = channel cube, flat DHW, zero pad)
      w_ref: (OC*C*kD*kH*kW,)      f32 SMEM  (PyTorch OIDHW order, flattened)
      b_ref: (OC,)                 f32 SMEM
      o_ref: (N*OC, 128)           f32 VMEM  ("embedded" output: lane zd*H*W+zh*W+zw)
    """

    def kernel(x_ref, w_ref, b_ref, o_ref):
        for b in range(n):
            # One (1,128) row per input channel, loaded once per batch and
            # reused by every tap.
            rows = [x_ref[b * c_in + c: b * c_in + c + 1, :] for c in range(c_in)]
            # One accumulator vreg-row per output channel, bias folded in.
            accs = [jnp.full((1, _LANES), b_ref[o], dtype=jnp.float32)
                    for o in range(oc)]
            # Taps outermost, output channels innermost: 1 live tap + OC accs.
            for i in range(kd):
                for j in range(kh):
                    for k in range(kw):
                        s = i * h * w + j * w + k          # lane offset of this tap
                        shift = (_LANES - s) % _LANES      # jnp.roll semantics
                        for c in range(c_in):
                            tap = rows[c] if shift == 0 else pltpu.roll(
                                rows[c], shift, axis=1)
                            for o in range(oc):
                                widx = (((o * c_in + c) * kd + i) * kh + j) * kw + k
                                accs[o] = accs[o] + w_ref[widx] * tap
            # One full-lane (unmasked) store per output channel.
            for o in range(oc):
                r = b * oc + o
                o_ref[r:r + 1, :] = accs[o]

    return kernel


def conv3d_pallas(x, weight, bias):
    """3D convolution, stride 1, no padding, as a single fused Pallas kernel.

    x:      (N, C, D, H, W)   float32
    weight: (OC, C, kD, kH, kW)
    bias:   (OC,)
    returns (N, OC, OD, OH, OW)
    """
    n, c, d, h, w = x.shape
    oc, ci, kd, kh, kw = weight.shape
    assert ci == c, (ci, c)
    od, oh, ow = d - kd + 1, h - kh + 1, w - kw + 1
    flat = d * h * w
    assert flat <= _LANES, "tiny-shape kernel: DHW cube must fit in one lane row"

    x = x.astype(jnp.float32)
    # Lane-dense input slab: (N*C, 128) == a single (8,128) VMEM tile for this shape.
    xf = x.reshape(n * c, flat)
    xp = jnp.pad(xf, ((0, 0), (0, _LANES - flat)))

    out_elems = n * oc * od * oh * ow
    flops = 2 * out_elems * c * kd * kh * kw
    bytes_accessed = 4 * (n * c * _LANES + weight.size + bias.size + n * oc * _LANES)

    out = pl.pallas_call(
        _make_conv3d_kernel(n, c, oc, d, h, w, kd, kh, kw),
        out_shape=jax.ShapeDtypeStruct((n * oc, _LANES), jnp.float32),
        in_specs=[
            pl.BlockSpec(memory_space=pltpu.MemorySpace.VMEM),   # padded input slab
            pl.BlockSpec(memory_space=pltpu.MemorySpace.SMEM),   # flat weights
            pl.BlockSpec(memory_space=pltpu.MemorySpace.SMEM),   # bias
        ],
        out_specs=pl.BlockSpec(memory_space=pltpu.MemorySpace.VMEM),
        cost_estimate=pl.CostEstimate(
            flops=flops, transcendentals=0, bytes_accessed=bytes_accessed),
    )(xp, weight.reshape(-1).astype(jnp.float32), bias.astype(jnp.float32))

    # Undo the embedded layout: lane zd*H*W + zh*W + zw  ->  (zd, zh, zw).
    # This is a plain XLA reshape + static slice (no gather, no transpose).
    y = out[:, :flat].reshape(n, oc, d, h, w)[:, :, :od, :oh, :ow]
    return y


@jax.jit
def model_forward(x2, params):
    """Pallas analogue of Model.forward (first Conv3d of the Sequential)."""
    w1, b1 = params["conv1_w"], params["conv1_b"]
    y = conv3d_pallas(x2, w1, b1)
    # TODO(synk): nn.Conv3d(3, 5, 3, bias=False) cannot consume the 4-channel
    # output above (in_channels mismatch); PyTorch forward raises here.
    return y


def init_params(key):
    k1, k2, k3 = jax.random.split(key, 3)
    # Conv3d(3, 4, kernel_size=2, bias=True): weight (4,3,2,2,2), bias (4,)
    fan_in1 = 3 * 2 * 2 * 2
    bound1 = 1.0 / (fan_in1 ** 0.5)
    conv1_w = jax.random.uniform(k1, (4, 3, 2, 2, 2), jnp.float32, -bound1, bound1)
    conv1_b = jax.random.uniform(k2, (4,), jnp.float32, -bound1, bound1)
    # Conv3d(3, 5, kernel_size=3, bias=False): declared but unusable in the
    # forward pass (channel mismatch); kept for shape fidelity.
    fan_in2 = 3 * 3 * 3 * 3
    bound2 = 1.0 / (fan_in2 ** 0.5)
    conv2_w = jax.random.uniform(k3, (5, 3, 3, 3, 3), jnp.float32, -bound2, bound2)
    return {"conv1_w": conv1_w, "conv1_b": conv1_b, "conv2_w": conv2_w}


if __name__ == "__main__":
    key = jax.random.PRNGKey(0)
    kx, kp = jax.random.split(key)

    # Input matching the module's x2 = torch.randn(1, 3, 4, 4, 4)
    x2 = jax.random.normal(kx, (1, 3, 4, 4, 4), jnp.float32)
    params = init_params(kp)

    y = model_forward(x2, params)
    y = jax.block_until_ready(y)

    # Reference check against XLA's conv (NCDHW, stride 1, VALID padding).
    ref = jax.lax.conv_general_dilated(
        x2, params["conv1_w"], window_strides=(1, 1, 1), padding="VALID",
        dimension_numbers=("NCDHW", "OIDHW", "NCDHW"),
    ) + params["conv1_b"][None, :, None, None, None]

    assert y.shape == (1, 4, 3, 3, 3), y.shape
    err = float(jnp.max(jnp.abs(y - ref)))
    assert jnp.allclose(y, ref, atol=1e-5, rtol=1e-5), err
    print("KERNEL_OK")
</pallas_src>

<mosaic_0001>
module attributes {stable_mosaic.version = 11 : i64} {
  func.func @kernel(%arg0: memref<3x128xf32, #tpu.memory_space<vmem>>, %arg1: memref<96xf32, #tpu.memory_space<smem>>, %arg2: memref<4xf32, #tpu.memory_space<smem>>, %arg3: memref<4x128xf32, #tpu.memory_space<vmem>>) attributes {dimension_semantics = [], scalar_prefetch = 0 : i64, scratch_operands = 0 : i64, tpu.core_type = #tpu.core_type<tc>} {
    %c0 = arith.constant 0 : index
    %c0_0 = arith.constant 0 : index
    %0 = vector.load %arg0[%c0, %c0_0] : memref<3x128xf32, #tpu.memory_space<vmem>>, vector<1x128xf32>
    %c1 = arith.constant 1 : index
    %c0_1 = arith.constant 0 : index
    %1 = vector.load %arg0[%c1, %c0_1] : memref<3x128xf32, #tpu.memory_space<vmem>>, vector<1x128xf32>
    %c2 = arith.constant 2 : index
    %c0_2 = arith.constant 0 : index
    %2 = vector.load %arg0[%c2, %c0_2] : memref<3x128xf32, #tpu.memory_space<vmem>>, vector<1x128xf32>
    %c0_3 = arith.constant 0 : index
    %3 = memref.load %arg2[%c0_3] : memref<4xf32, #tpu.memory_space<smem>>
    %4 = vector.broadcast %3 : f32 to vector<1x128xf32>
    %c1_4 = arith.constant 1 : index
    %5 = memref.load %arg2[%c1_4] : memref<4xf32, #tpu.memory_space<smem>>
    %6 = vector.broadcast %5 : f32 to vector<1x128xf32>
    %c2_5 = arith.constant 2 : index
    %7 = memref.load %arg2[%c2_5] : memref<4xf32, #tpu.memory_space<smem>>
    %8 = vector.broadcast %7 : f32 to vector<1x128xf32>
    %c3 = arith.constant 3 : index
    %9 = memref.load %arg2[%c3] : memref<4xf32, #tpu.memory_space<smem>>
    %10 = vector.broadcast %9 : f32 to vector<1x128xf32>
    %c0_6 = arith.constant 0 : index
    %11 = memref.load %arg1[%c0_6] : memref<96xf32, #tpu.memory_space<smem>>
    %12 = vector.broadcast %11 : f32 to vector<1x128xf32>
    %13 = arith.mulf %12, %0 : vector<1x128xf32>
    %14 = arith.addf %4, %13 : vector<1x128xf32>
    %c24 = arith.constant 24 : index
    %15 = memref.load %arg1[%c24] : memref<96xf32, #tpu.memory_space<smem>>
    %16 = vector.broadcast %15 : f32 to vector<1x128xf32>
    %17 = arith.mulf %16, %0 : vector<1x128xf32>
    %18 = arith.addf %6, %17 : vector<1x128xf32>
    %c48 = arith.constant 48 : index
    %19 = memref.load %arg1[%c48] : memref<96xf32, #tpu.memory_space<smem>>
    %20 = vector.broadcast %19 : f32 to vector<1x128xf32>
    %21 = arith.mulf %20, %0 : vector<1x128xf32>
    %22 = arith.addf %8, %21 : vector<1x128xf32>
    %c72 = arith.constant 72 : index
    %23 = memref.load %arg1[%c72] : memref<96xf32, #tpu.memory_space<smem>>
    %24 = vector.broadcast %23 : f32 to vector<1x128xf32>
    %25 = arith.mulf %24, %0 : vector<1x128xf32>
    %26 = arith.addf %10, %25 : vector<1x128xf32>
    %c8 = arith.constant 8 : index
    %27 = memref.load %arg1[%c8] : memref<96xf32, #tpu.memory_space<smem>>
    %28 = vector.broadcast %27 : f32 to vector<1x128xf32>
    %29 = arith.mulf %28, %1 : vector<1x128xf32>
    %30 = arith.addf %14, %29 : vector<1x128xf32>
    %c32 = arith.constant 32 : index
    %31 = memref.load %arg1[%c32] : memref<96xf32, #tpu.memory_space<smem>>
    %32 = vector.broadcast %31 : f32 to vector<1x128xf32>
    %33 = arith.mulf %32, %1 : vector<1x128xf32>
    %34 = arith.addf %18, %33 : vector<1x128xf32>
    %c56 = arith.constant 56 : index
    %35 = memref.load %arg1[%c56] : memref<96xf32, #tpu.memory_space<smem>>
    %36 = vector.broadcast %35 : f32 to vector<1x128xf32>
    %37 = arith.mulf %36, %1 : vector<1x128xf32>
    %38 = arith.addf %22, %37 : vector<1x128xf32>
    %c80 = arith.constant 80 : index
    %39 = memref.load %arg1[%c80] : memref<96xf32, #tpu.memory_space<smem>>
    %40 = vector.broadcast %39 : f32 to vector<1x128xf32>
    %41 = arith.mulf %40, %1 : vector<1x128xf32>
    %42 = arith.addf %26, %41 : vector<1x128xf32>
    %c16 = arith.constant 16 : index
    %43 = memref.load %arg1[%c16] : memref<96xf32, #tpu.memory_space<smem>>
    %44 = vector.broadcast %43 : f32 to vector<1x128xf32>
    %45 = arith.mulf %44, %2 : vector<1x128xf32>
    %46 = arith.addf %30, %45 : vector<1x128xf32>
    %c40 = arith.constant 40 : index
    %47 = memref.load %arg1[%c40] : memref<96xf32, #tpu.memory_space<smem>>
    %48 = vector.broadcast %47 : f32 to vector<1x128xf32>
    %49 = arith.mulf %48, %2 : vector<1x128xf32>
    %50 = arith.addf %34, %49 : vector<1x128xf32>
    %c64 = arith.constant 64 : index
    %51 = memref.load %arg1[%c64] : memref<96xf32, #tpu.memory_space<smem>>
    %52 = vector.broadcast %51 : f32 to vector<1x128xf32>
    %53 = arith.mulf %52, %2 : vector<1x128xf32>
    %54 = arith.addf %38, %53 : vector<1x128xf32>
    %c88 = arith.constant 88 : index
    %55 = memref.load %arg1[%c88] : memref<96xf32, #tpu.memory_space<smem>>
    %56 = vector.broadcast %55 : f32 to vector<1x128xf32>
    %57 = arith.mulf %56, %2 : vector<1x128xf32>
    %58 = arith.addf %42, %57 : vector<1x128xf32>
    %c127_i32 = arith.constant 127 : i32
    %59 = tpu.dynamic_rotate %0 by %c127_i32 dim 1 : vector<1x128xf32>, i32 -> vector<1x128xf32>
    %c1_7 = arith.constant 1 : index
    %60 = memref.load %arg1[%c1_7] : memref<96xf32, #tpu.memory_space<smem>>
    %61 = vector.broadcast %60 : f32 to vector<1x128xf32>
    %62 = arith.mulf %61, %59 : vector<1x128xf32>
    %63 = arith.addf %46, %62 : vector<1x128xf32>
    %c25 = arith.constant 25 : index
    %64 = memref.load %arg1[%c25] : memref<96xf32, #tpu.memory_space<smem>>
    %65 = vector.broadcast %64 : f32 to vector<1x128xf32>
    %66 = arith.mulf %65, %59 : vector<1x128xf32>
    %67 = arith.addf %50, %66 : vector<1x128xf32>
    %c49 = arith.constant 49 : index
    %68 = memref.load %arg1[%c49] : memref<96xf32, #tpu.memory_space<smem>>
    %69 = vector.broadcast %68 : f32 to vector<1x128xf32>
    %70 = arith.mulf %69, %59 : vector<1x128xf32>
    %71 = arith.addf %54, %70 : vector<1x128xf32>
    %c73 = arith.constant 73 : index
    %72 = memref.load %arg1[%c73] : memref<96xf32, #tpu.memory_space<smem>>
    %73 = vector.broadcast %72 : f32 to vector<1x128xf32>
    %74 = arith.mulf %73, %59 : vector<1x128xf32>
    %75 = arith.addf %58, %74 : vector<1x128xf32>
    %c127_i32_8 = arith.constant 127 : i32
    %76 = tpu.dynamic_rotate %1 by %c127_i32_8 dim 1 : vector<1x128xf32>, i32 -> vector<1x128xf32>
    %c9 = arith.constant 9 : index
    %77 = memref.load %arg1[%c9] : memref<96xf32, #tpu.memory_space<smem>>
    %78 = vector.broadcast %77 : f32 to vector<1x128xf32>
    %79 = arith.mulf %78, %76 : vector<1x128xf32>
    %80 = arith.addf %63, %79 : vector<1x128xf32>
    %c33 = arith.constant 33 : index
    %81 = memref.load %arg1[%c33] : memref<96xf32, #tpu.memory_space<smem>>
    %82 = vector.broadcast %81 : f32 to vector<1x128xf32>
    %83 = arith.mulf %82, %76 : vector<1x128xf32>
    %84 = arith.addf %67, %83 : vector<1x128xf32>
    %c57 = arith.constant 57 : index
    %85 = memref.load %arg1[%c57] : memref<96xf32, #tpu.memory_space<smem>>
    %86 = vector.broadcast %85 : f32 to vector<1x128xf32>
    %87 = arith.mulf %86, %76 : vector<1x128xf32>
    %88 = arith.addf %71, %87 : vector<1x128xf32>
    %c81 = arith.constant 81 : index
    %89 = memref.load %arg1[%c81] : memref<96xf32, #tpu.memory_space<smem>>
    %90 = vector.broadcast %89 : f32 to vector<1x128xf32>
    %91 = arith.mulf %90, %76 : vector<1x128xf32>
    %92 = arith.addf %75, %91 : vector<1x128xf32>
    %c127_i32_9 = arith.constant 127 : i32
    %93 = tpu.dynamic_rotate %2 by %c127_i32_9 dim 1 : vector<1x128xf32>, i32 -> vector<1x128xf32>
    %c17 = arith.constant 17 : index
    %94 = memref.load %arg1[%c17] : memref<96xf32, #tpu.memory_space<smem>>
    %95 = vector.broadcast %94 : f32 to vector<1x128xf32>
    %96 = arith.mulf %95, %93 : vector<1x128xf32>
    %97 = arith.addf %80, %96 : vector<1x128xf32>
    %c41 = arith.constant 41 : index
    %98 = memref.load %arg1[%c41] : memref<96xf32, #tpu.memory_space<smem>>
    %99 = vector.broadcast %98 : f32 to vector<1x128xf32>
    %100 = arith.mulf %99, %93 : vector<1x128xf32>
    %101 = arith.addf %84, %100 : vector<1x128xf32>
    %c65 = arith.constant 65 : index
    %102 = memref.load %arg1[%c65] : memref<96xf32, #tpu.memory_space<smem>>
    %103 = vector.broadcast %102 : f32 to vector<1x128xf32>
    %104 = arith.mulf %103, %93 : vector<1x128xf32>
    %105 = arith.addf %88, %104 : vector<1x128xf32>
    %c89 = arith.constant 89 : index
    %106 = memref.load %arg1[%c89] : memref<96xf32, #tpu.memory_space<smem>>
    %107 = vector.broadcast %106 : f32 to vector<1x128xf32>
    %108 = arith.mulf %107, %93 : vector<1x128xf32>
    %109 = arith.addf %92, %108 : vector<1x128xf32>
    %c124_i32 = arith.constant 124 : i32
    %110 = tpu.dynamic_rotate %0 by %c124_i32 dim 1 : vector<1x128xf32>, i32 -> vector<1x128xf32>
    %c2_10 = arith.constant 2 : index
    %111 = memref.load %arg1[%c2_10] : memref<96xf32, #tpu.memory_space<smem>>
    %112 = vector.broadcast %111 : f32 to vector<1x128xf32>
    %113 = arith.mulf %112, %110 : vector<1x128xf32>
    %114 = arith.addf %97, %113 : vector<1x128xf32>
    %c26 = arith.constant 26 : index
    %115 = memref.load %arg1[%c26] : memref<96xf32, #tpu.memory_space<smem>>
    %116 = vector.broadcast %115 : f32 to vector<1x128xf32>
    %117 = arith.mulf %116, %110 : vector<1x128xf32>
    %118 = arith.addf %101, %117 : vector<1x128xf32>
    %c50 = arith.constant 50 : index
    %119 = memref.load %arg1[%c50] : memref<96xf32, #tpu.memory_space<smem>>
    %120 = vector.broadcast %119 : f32 to vector<1x128xf32>
    %121 = arith.mulf %120, %110 : vector<1x128xf32>
    %122 = arith.addf %105, %121 : vector<1x128xf32>
    %c74 = arith.constant 74 : index
    %123 = memref.load %arg1[%c74] : memref<96xf32, #tpu.memory_space<smem>>
    %124 = vector.broadcast %123 : f32 to vector<1x128xf32>
    %125 = arith.mulf %124, %110 : vector<1x128xf32>
    %126 = arith.addf %109, %125 : vector<1x128xf32>
    %c124_i32_11 = arith.constant 124 : i32
    %127 = tpu.dynamic_rotate %1 by %c124_i32_11 dim 1 : vector<1x128xf32>, i32 -> vector<1x128xf32>
    %c10 = arith.constant 10 : index
    %128 = memref.load %arg1[%c10] : memref<96xf32, #tpu.memory_space<smem>>
    %129 = vector.broadcast %128 : f32 to vector<1x128xf32>
    %130 = arith.mulf %129, %127 : vector<1x128xf32>
    %131 = arith.addf %114, %130 : vector<1x128xf32>
    %c34 = arith.constant 34 : index
    %132 = memref.load %arg1[%c34] : memref<96xf32, #tpu.memory_space<smem>>
    %133 = vector.broadcast %132 : f32 to vector<1x128xf32>
    %134 = arith.mulf %133, %127 : vector<1x128xf32>
    %135 = arith.addf %118, %134 : vector<1x128xf32>
    %c58 = arith.constant 58 : index
    %136 = memref.load %arg1[%c58] : memref<96xf32, #tpu.memory_space<smem>>
    %137 = vector.broadcast %136 : f32 to vector<1x128xf32>
    %138 = arith.mulf %137, %127 : vector<1x128xf32>
    %139 = arith.addf %122, %138 : vector<1x128xf32>
    %c82 = arith.constant 82 : index
    %140 = memref.load %arg1[%c82] : memref<96xf32, #tpu.memory_space<smem>>
    %141 = vector.broadcast %140 : f32 to vector<1x128xf32>
    %142 = arith.mulf %141, %127 : vector<1x128xf32>
    %143 = arith.addf %126, %142 : vector<1x128xf32>
    %c124_i32_12 = arith.constant 124 : i32
    %144 = tpu.dynamic_rotate %2 by %c124_i32_12 dim 1 : vector<1x128xf32>, i32 -> vector<1x128xf32>
    %c18 = arith.constant 18 : index
    %145 = memref.load %arg1[%c18] : memref<96xf32, #tpu.memory_space<smem>>
    %146 = vector.broadcast %145 : f32 to vector<1x128xf32>
    %147 = arith.mulf %146, %144 : vector<1x128xf32>
    %148 = arith.addf %131, %147 : vector<1x128xf32>
    %c42 = arith.constant 42 : index
    %149 = memref.load %arg1[%c42] : memref<96xf32, #tpu.memory_space<smem>>
    %150 = vector.broadcast %149 : f32 to vector<1x128xf32>
    %151 = arith.mulf %150, %144 : vector<1x128xf32>
    %152 = arith.addf %135, %151 : vector<1x128xf32>
    %c66 = arith.constant 66 : index
    %153 = memref.load %arg1[%c66] : memref<96xf32, #tpu.memory_space<smem>>
    %154 = vector.broadcast %153 : f32 to vector<1x128xf32>
    %155 = arith.mulf %154, %144 : vector<1x128xf32>
    %156 = arith.addf %139, %155 : vector<1x128xf32>
    %c90 = arith.constant 90 : index
    %157 = memref.load %arg1[%c90] : memref<96xf32, #tpu.memory_space<smem>>
    %158 = vector.broadcast %157 : f32 to vector<1x128xf32>
    %159 = arith.mulf %158, %144 : vector<1x128xf32>
    %160 = arith.addf %143, %159 : vector<1x128xf32>
    %c123_i32 = arith.constant 123 : i32
    %161 = tpu.dynamic_rotate %0 by %c123_i32 dim 1 : vector<1x128xf32>, i32 -> vector<1x128xf32>
    %c3_13 = arith.constant 3 : index
    %162 = memref.load %arg1[%c3_13] : memref<96xf32, #tpu.memory_space<smem>>
    %163 = vector.broadcast %162 : f32 to vector<1x128xf32>
    %164 = arith.mulf %163, %161 : vector<1x128xf32>
    %165 = arith.addf %148, %164 : vector<1x128xf32>
    %c27 = arith.constant 27 : index
    %166 = memref.load %arg1[%c27] : memref<96xf32, #tpu.memory_space<smem>>
    %167 = vector.broadcast %166 : f32 to vector<1x128xf32>
    %168 = arith.mulf %167, %161 : vector<1x128xf32>
    %169 = arith.addf %152, %168 : vector<1x128xf32>
    %c51 = arith.constant 51 : index
    %170 = memref.load %arg1[%c51] : memref<96xf32, #tpu.memory_space<smem>>
    %171 = vector.broadcast %170 : f32 to vector<1x128xf32>
    %172 = arith.mulf %171, %161 : vector<1x128xf32>
    %173 = arith.addf %156, %172 : vector<1x128xf32>
    %c75 = arith.constant 75 : index
    %174 = memref.load %arg1[%c75] : memref<96xf32, #tpu.memory_space<smem>>
    %175 = vector.broadcast %174 : f32 to vector<1x128xf32>
    %176 = arith.mulf %175, %161 : vector<1x128xf32>
    %177 = arith.addf %160, %176 : vector<1x128xf32>
    %c123_i32_14 = arith.constant 123 : i32
    %178 = tpu.dynamic_rotate %1 by %c123_i32_14 dim 1 : vector<1x128xf32>, i32 -> vector<1x128xf32>
    %c11 = arith.constant 11 : index
    %179 = memref.load %arg1[%c11] : memref<96xf32, #tpu.memory_space<smem>>
    %180 = vector.broadcast %179 : f32 to vector<1x128xf32>
    %181 = arith.mulf %180, %178 : vector<1x128xf32>
    %182 = arith.addf %165, %181 : vector<1x128xf32>
    %c35 = arith.constant 35 : index
    %183 = memref.load %arg1[%c35] : memref<96xf32, #tpu.memory_space<smem>>
    %184 = vector.broadcast %183 : f32 to vector<1x128xf32>
    %185 = arith.mulf %184, %178 : vector<1x128xf32>
    %186 = arith.addf %169, %185 : vector<1x128xf32>
    %c59 = arith.constant 59 : index
    %187 = memref.load %arg1[%c59] : memref<96xf32, #tpu.memory_space<smem>>
    %188 = vector.broadcast %187 : f32 to vector<1x128xf32>
    %189 = arith.mulf %188, %178 : vector<1x128xf32>
    %190 = arith.addf %173, %189 : vector<1x128xf32>
    %c83 = arith.constant 83 : index
    %191 = memref.load %arg1[%c83] : memref<96xf32, #tpu.memory_space<smem>>
    %192 = vector.broadcast %191 : f32 to vector<1x128xf32>
    %193 = arith.mulf %192, %178 : vector<1x128xf32>
    %194 = arith.addf %177, %193 : vector<1x128xf32>
    %c123_i32_15 = arith.constant 123 : i32
    %195 = tpu.dynamic_rotate %2 by %c123_i32_15 dim 1 : vector<1x128xf32>, i32 -> vector<1x128xf32>
    %c19 = arith.constant 19 : index
    %196 = memref.load %arg1[%c19] : memref<96xf32, #tpu.memory_space<smem>>
    %197 = vector.broadcast %196 : f32 to vector<1x128xf32>
    %198 = arith.mulf %197, %195 : vector<1x128xf32>
    %199 = arith.addf %182, %198 : vector<1x128xf32>
    %c43 = arith.constant 43 : index
    %200 = memref.load %arg1[%c43] : memref<96xf32, #tpu.memory_space<smem>>
    %201 = vector.broadcast %200 : f32 to vector<1x128xf32>
    %202 = arith.mulf %201, %195 : vector<1x128xf32>
    %203 = arith.addf %186, %202 : vector<1x128xf32>
    %c67 = arith.constant 67 : index
    %204 = memref.load %arg1[%c67] : memref<96xf32, #tpu.memory_space<smem>>
    %205 = vector.broadcast %204 : f32 to vector<1x128xf32>
    %206 = arith.mulf %205, %195 : vector<1x128xf32>
    %207 = arith.addf %190, %206 : vector<1x128xf32>
    %c91 = arith.constant 91 : index
    %208 = memref.load %arg1[%c91] : memref<96xf32, #tpu.memory_space<smem>>
    %209 = vector.broadcast %208 : f32 to vector<1x128xf32>
    %210 = arith.mulf %209, %195 : vector<1x128xf32>
    %211 = arith.addf %194, %210 : vector<1x128xf32>
    %c112_i32 = arith.constant 112 : i32
    %212 = tpu.dynamic_rotate %0 by %c112_i32 dim 1 : vector<1x128xf32>, i32 -> vector<1x128xf32>
    %c4 = arith.constant 4 : index
    %213 = memref.load %arg1[%c4] : memref<96xf32, #tpu.memory_space<smem>>
    %214 = vector.broadcast %213 : f32 to vector<1x128xf32>
    %215 = arith.mulf %214, %212 : vector<1x128xf32>
    %216 = arith.addf %199, %215 : vector<1x128xf32>
    %c28 = arith.constant 28 : index
    %217 = memref.load %arg1[%c28] : memref<96xf32, #tpu.memory_space<smem>>
    %218 = vector.broadcast %217 : f32 to vector<1x128xf32>
    %219 = arith.mulf %218, %212 : vector<1x128xf32>
    %220 = arith.addf %203, %219 : vector<1x128xf32>
    %c52 = arith.constant 52 : index
    %221 = memref.load %arg1[%c52] : memref<96xf32, #tpu.memory_space<smem>>
    %222 = vector.broadcast %221 : f32 to vector<1x128xf32>
    %223 = arith.mulf %222, %212 : vector<1x128xf32>
    %224 = arith.addf %207, %223 : vector<1x128xf32>
    %c76 = arith.constant 76 : index
    %225 = memref.load %arg1[%c76] : memref<96xf32, #tpu.memory_space<smem>>
    %226 = vector.broadcast %225 : f32 to vector<1x128xf32>
    %227 = arith.mulf %226, %212 : vector<1x128xf32>
    %228 = arith.addf %211, %227 : vector<1x128xf32>
    %c112_i32_16 = arith.constant 112 : i32
    %229 = tpu.dynamic_rotate %1 by %c112_i32_16 dim 1 : vector<1x128xf32>, i32 -> vector<1x128xf32>
    %c12 = arith.constant 12 : index
    %230 = memref.load %arg1[%c12] : memref<96xf32, #tpu.memory_space<smem>>
    %231 = vector.broadcast %230 : f32 to vector<1x128xf32>
    %232 = arith.mulf %231, %229 : vector<1x128xf32>
    %233 = arith.addf %216, %232 : vector<1x128xf32>
    %c36 = arith.constant 36 : index
    %234 = memref.load %arg1[%c36] : memref<96xf32, #tpu.memory_space<smem>>
    %235 = vector.broadcast %234 : f32 to vector<1x128xf32>
    %236 = arith.mulf %235, %229 : vector<1x128xf32>
    %237 = arith.addf %220, %236 : vector<1x128xf32>
    %c60 = arith.constant 60 : index
    %238 = memref.load %arg1[%c60] : memref<96xf32, #tpu.memory_space<smem>>
    %239 = vector.broadcast %238 : f32 to vector<1x128xf32>
    %240 = arith.mulf %239, %229 : vector<1x128xf32>
    %241 = arith.addf %224, %240 : vector<1x128xf32>
    %c84 = arith.constant 84 : index
    %242 = memref.load %arg1[%c84] : memref<96xf32, #tpu.memory_space<smem>>
    %243 = vector.broadcast %242 : f32 to vector<1x128xf32>
    %244 = arith.mulf %243, %229 : vector<1x128xf32>
    %245 = arith.addf %228, %244 : vector<1x128xf32>
    %c112_i32_17 = arith.constant 112 : i32
    %246 = tpu.dynamic_rotate %2 by %c112_i32_17 dim 1 : vector<1x128xf32>, i32 -> vector<1x128xf32>
    %c20 = arith.constant 20 : index
    %247 = memref.load %arg1[%c20] : memref<96xf32, #tpu.memory_space<smem>>
    %248 = vector.broadcast %247 : f32 to vector<1x128xf32>
    %249 = arith.mulf %248, %246 : vector<1x128xf32>
    %250 = arith.addf %233, %249 : vector<1x128xf32>
    %c44 = arith.constant 44 : index
    %251 = memref.load %arg1[%c44] : memref<96xf32, #tpu.memory_space<smem>>
    %252 = vector.broadcast %251 : f32 to vector<1x128xf32>
    %253 = arith.mulf %252, %246 : vector<1x128xf32>
    %254 = arith.addf %237, %253 : vector<1x128xf32>
    %c68 = arith.constant 68 : index
    %255 = memref.load %arg1[%c68] : memref<96xf32, #tpu.memory_space<smem>>
    %256 = vector.broadcast %255 : f32 to vector<1x128xf32>
    %257 = arith.mulf %256, %246 : vector<1x128xf32>
    %258 = arith.addf %241, %257 : vector<1x128xf32>
    %c92 = arith.constant 92 : index
    %259 = memref.load %arg1[%c92] : memref<96xf32, #tpu.memory_space<smem>>
    %260 = vector.broadcast %259 : f32 to vector<1x128xf32>
    %261 = arith.mulf %260, %246 : vector<1x128xf32>
    %262 = arith.addf %245, %261 : vector<1x128xf32>
    %c111_i32 = arith.constant 111 : i32
    %263 = tpu.dynamic_rotate %0 by %c111_i32 dim 1 : vector<1x128xf32>, i32 -> vector<1x128xf32>
    %c5 = arith.constant 5 : index
    %264 = memref.load %arg1[%c5] : memref<96xf32, #tpu.memory_space<smem>>
    %265 = vector.broadcast %264 : f32 to vector<1x128xf32>
    %266 = arith.mulf %265, %263 : vector<1x128xf32>
    %267 = arith.addf %250, %266 : vector<1x128xf32>
    %c29 = arith.constant 29 : index
    %268 = memref.load %arg1[%c29] : memref<96xf32, #tpu.memory_space<smem>>
    %269 = vector.broadcast %268 : f32 to vector<1x128xf32>
    %270 = arith.mulf %269, %263 : vector<1x128xf32>
    %271 = arith.addf %254, %270 : vector<1x128xf32>
    %c53 = arith.constant 53 : index
    %272 = memref.load %arg1[%c53] : memref<96xf32, #tpu.memory_space<smem>>
    %273 = vector.broadcast %272 : f32 to vector<1x128xf32>
    %274 = arith.mulf %273, %263 : vector<1x128xf32>
    %275 = arith.addf %258, %274 : vector<1x128xf32>
    %c77 = arith.constant 77 : index
    %276 = memref.load %arg1[%c77] : memref<96xf32, #tpu.memory_space<smem>>
    %277 = vector.broadcast %276 : f32 to vector<1x128xf32>
    %278 = arith.mulf %277, %263 : vector<1x128xf32>
    %279 = arith.addf %262, %278 : vector<1x128xf32>
    %c111_i32_18 = arith.constant 111 : i32
    %280 = tpu.dynamic_rotate %1 by %c111_i32_18 dim 1 : vector<1x128xf32>, i32 -> vector<1x128xf32>
    %c13 = arith.constant 13 : index
    %281 = memref.load %arg1[%c13] : memref<96xf32, #tpu.memory_space<smem>>
    %282 = vector.broadcast %281 : f32 to vector<1x128xf32>
    %283 = arith.mulf %282, %280 : vector<1x128xf32>
    %284 = arith.addf %267, %283 : vector<1x128xf32>
    %c37 = arith.constant 37 : index
    %285 = memref.load %arg1[%c37] : memref<96xf32, #tpu.memory_space<smem>>
    %286 = vector.broadcast %285 : f32 to vector<1x128xf32>
    %287 = arith.mulf %286, %280 : vector<1x128xf32>
    %288 = arith.addf %271, %287 : vector<1x128xf32>
    %c61 = arith.constant 61 : index
    %289 = memref.load %arg1[%c61] : memref<96xf32, #tpu.memory_space<smem>>
    %290 = vector.broadcast %289 : f32 to vector<1x128xf32>
    %291 = arith.mulf %290, %280 : vector<1x128xf32>
    %292 = arith.addf %275, %291 : vector<1x128xf32>
    %c85 = arith.constant 85 : index
    %293 = memref.load %arg1[%c85] : memref<96xf32, #tpu.memory_space<smem>>
    %294 = vector.broadcast %293 : f32 to vector<1x128xf32>
    %295 = arith.mulf %294, %280 : vector<1x128xf32>
    %296 = arith.addf %279, %295 : vector<1x128xf32>
    %c111_i32_19 = arith.constant 111 : i32
    %297 = tpu.dynamic_rotate %2 by %c111_i32_19 dim 1 : vector<1x128xf32>, i32 -> vector<1x128xf32>
    %c21 = arith.constant 21 : index
    %298 = memref.load %arg1[%c21] : memref<96xf32, #tpu.memory_space<smem>>
    %299 = vector.broadcast %298 : f32 to vector<1x128xf32>
    %300 = arith.mulf %299, %297 : vector<1x128xf32>
    %301 = arith.addf %284, %300 : vector<1x128xf32>
    %c45 = arith.constant 45 : index
    %302 = memref.load %arg1[%c45] : memref<96xf32, #tpu.memory_space<smem>>
    %303 = vector.broadcast %302 : f32 to vector<1x128xf32>
    %304 = arith.mulf %303, %297 : vector<1x128xf32>
    %305 = arith.addf %288, %304 : vector<1x128xf32>
    %c69 = arith.constant 69 : index
    %306 = memref.load %arg1[%c69] : memref<96xf32, #tpu.memory_space<smem>>
    %307 = vector.broadcast %306 : f32 to vector<1x128xf32>
    %308 = arith.mulf %307, %297 : vector<1x128xf32>
    %309 = arith.addf %292, %308 : vector<1x128xf32>
    %c93 = arith.constant 93 : index
    %310 = memref.load %arg1[%c93] : memref<96xf32, #tpu.memory_space<smem>>
    %311 = vector.broadcast %310 : f32 to vector<1x128xf32>
    %312 = arith.mulf %311, %297 : vector<1x128xf32>
    %313 = arith.addf %296, %312 : vector<1x128xf32>
    %c108_i32 = arith.constant 108 : i32
    %314 = tpu.dynamic_rotate %0 by %c108_i32 dim 1 : vector<1x128xf32>, i32 -> vector<1x128xf32>
    %c6 = arith.constant 6 : index
    %315 = memref.load %arg1[%c6] : memref<96xf32, #tpu.memory_space<smem>>
    %316 = vector.broadcast %315 : f32 to vector<1x128xf32>
    %317 = arith.mulf %316, %314 : vector<1x128xf32>
    %318 = arith.addf %301, %317 : vector<1x128xf32>
    %c30 = arith.constant 30 : index
    %319 = memref.load %arg1[%c30] : memref<96xf32, #tpu.memory_space<smem>>
    %320 = vector.broadcast %319 : f32 to vector<1x128xf32>
    %321 = arith.mulf %320, %314 : vector<1x128xf32>
    %322 = arith.addf %305, %321 : vector<1x128xf32>
    %c54 = arith.constant 54 : index
    %323 = memref.load %arg1[%c54] : memref<96xf32, #tpu.memory_space<smem>>
    %324 = vector.broadcast %323 : f32 to vector<1x128xf32>
    %325 = arith.mulf %324, %314 : vector<1x128xf32>
    %326 = arith.addf %309, %325 : vector<1x128xf32>
    %c78 = arith.constant 78 : index
    %327 = memref.load %arg1[%c78] : memref<96xf32, #tpu.memory_space<smem>>
    %328 = vector.broadcast %327 : f32 to vector<1x128xf32>
    %329 = arith.mulf %328, %314 : vector<1x128xf32>
    %330 = arith.addf %313, %329 : vector<1x128xf32>
    %c108_i32_20 = arith.constant 108 : i32
    %331 = tpu.dynamic_rotate %1 by %c108_i32_20 dim 1 : vector<1x128xf32>, i32 -> vector<1x128xf32>
    %c14 = arith.constant 14 : index
    %332 = memref.load %arg1[%c14] : memref<96xf32, #tpu.memory_space<smem>>
    %333 = vector.broadcast %332 : f32 to vector<1x128xf32>
    %334 = arith.mulf %333, %331 : vector<1x128xf32>
    %335 = arith.addf %318, %334 : vector<1x128xf32>
    %c38 = arith.constant 38 : index
    %336 = memref.load %arg1[%c38] : memref<96xf32, #tpu.memory_space<smem>>
    %337 = vector.broadcast %336 : f32 to vector<1x128xf32>
    %338 = arith.mulf %337, %331 : vector<1x128xf32>
    %339 = arith.addf %322, %338 : vector<1x128xf32>
    %c62 = arith.constant 62 : index
    %340 = memref.load %arg1[%c62] : memref<96xf32, #tpu.memory_space<smem>>
    %341 = vector.broadcast %340 : f32 to vector<1x128xf32>
    %342 = arith.mulf %341, %331 : vector<1x128xf32>
    %343 = arith.addf %326, %342 : vector<1x128xf32>
    %c86 = arith.constant 86 : index
    %344 = memref.load %arg1[%c86] : memref<96xf32, #tpu.memory_space<smem>>
    %345 = vector.broadcast %344 : f32 to vector<1x128xf32>
    %346 = arith.mulf %345, %331 : vector<1x128xf32>
    %347 = arith.addf %330, %346 : vector<1x128xf32>
    %c108_i32_21 = arith.constant 108 : i32
    %348 = tpu.dynamic_rotate %2 by %c108_i32_21 dim 1 : vector<1x128xf32>, i32 -> vector<1x128xf32>
    %c22 = arith.constant 22 : index
    %349 = memref.load %arg1[%c22] : memref<96xf32, #tpu.memory_space<smem>>
    %350 = vector.broadcast %349 : f32 to vector<1x128xf32>
    %351 = arith.mulf %350, %348 : vector<1x128xf32>
    %352 = arith.addf %335, %351 : vector<1x128xf32>
    %c46 = arith.constant 46 : index
    %353 = memref.load %arg1[%c46] : memref<96xf32, #tpu.memory_space<smem>>
    %354 = vector.broadcast %353 : f32 to vector<1x128xf32>
    %355 = arith.mulf %354, %348 : vector<1x128xf32>
    %356 = arith.addf %339, %355 : vector<1x128xf32>
    %c70 = arith.constant 70 : index
    %357 = memref.load %arg1[%c70] : memref<96xf32, #tpu.memory_space<smem>>
    %358 = vector.broadcast %357 : f32 to vector<1x128xf32>
    %359 = arith.mulf %358, %348 : vector<1x128xf32>
    %360 = arith.addf %343, %359 : vector<1x128xf32>
    %c94 = arith.constant 94 : index
    %361 = memref.load %arg1[%c94] : memref<96xf32, #tpu.memory_space<smem>>
    %362 = vector.broadcast %361 : f32 to vector<1x128xf32>
    %363 = arith.mulf %362, %348 : vector<1x128xf32>
    %364 = arith.addf %347, %363 : vector<1x128xf32>
    %c107_i32 = arith.constant 107 : i32
    %365 = tpu.dynamic_rotate %0 by %c107_i32 dim 1 : vector<1x128xf32>, i32 -> vector<1x128xf32>
    %c7 = arith.constant 7 : index
    %366 = memref.load %arg1[%c7] : memref<96xf32, #tpu.memory_space<smem>>
    %367 = vector.broadcast %366 : f32 to vector<1x128xf32>
    %368 = arith.mulf %367, %365 : vector<1x128xf32>
    %369 = arith.addf %352, %368 : vector<1x128xf32>
    %c31 = arith.constant 31 : index
    %370 = memref.load %arg1[%c31] : memref<96xf32, #tpu.memory_space<smem>>
    %371 = vector.broadcast %370 : f32 to vector<1x128xf32>
    %372 = arith.mulf %371, %365 : vector<1x128xf32>
    %373 = arith.addf %356, %372 : vector<1x128xf32>
    %c55 = arith.constant 55 : index
    %374 = memref.load %arg1[%c55] : memref<96xf32, #tpu.memory_space<smem>>
    %375 = vector.broadcast %374 : f32 to vector<1x128xf32>
    %376 = arith.mulf %375, %365 : vector<1x128xf32>
    %377 = arith.addf %360, %376 : vector<1x128xf32>
    %c79 = arith.constant 79 : index
    %378 = memref.load %arg1[%c79] : memref<96xf32, #tpu.memory_space<smem>>
    %379 = vector.broadcast %378 : f32 to vector<1x128xf32>
    %380 = arith.mulf %379, %365 : vector<1x128xf32>
    %381 = arith.addf %364, %380 : vector<1x128xf32>
    %c107_i32_22 = arith.constant 107 : i32
    %382 = tpu.dynamic_rotate %1 by %c107_i32_22 dim 1 : vector<1x128xf32>, i32 -> vector<1x128xf32>
    %c15 = arith.constant 15 : index
    %383 = memref.load %arg1[%c15] : memref<96xf32, #tpu.memory_space<smem>>
    %384 = vector.broadcast %383 : f32 to vector<1x128xf32>
    %385 = arith.mulf %384, %382 : vector<1x128xf32>
    %386 = arith.addf %369, %385 : vector<1x128xf32>
    %c39 = arith.constant 39 : index
    %387 = memref.load %arg1[%c39] : memref<96xf32, #tpu.memory_space<smem>>
    %388 = vector.broadcast %387 : f32 to vector<1x128xf32>
    %389 = arith.mulf %388, %382 : vector<1x128xf32>
    %390 = arith.addf %373, %389 : vector<1x128xf32>
    %c63 = arith.constant 63 : index
    %391 = memref.load %arg1[%c63] : memref<96xf32, #tpu.memory_space<smem>>
    %392 = vector.broadcast %391 : f32 to vector<1x128xf32>
    %393 = arith.mulf %392, %382 : vector<1x128xf32>
    %394 = arith.addf %377, %393 : vector<1x128xf32>
    %c87 = arith.constant 87 : index
    %395 = memref.load %arg1[%c87] : memref<96xf32, #tpu.memory_space<smem>>
    %396 = vector.broadcast %395 : f32 to vector<1x128xf32>
    %397 = arith.mulf %396, %382 : vector<1x128xf32>
    %398 = arith.addf %381, %397 : vector<1x128xf32>
    %c107_i32_23 = arith.constant 107 : i32
    %399 = tpu.dynamic_rotate %2 by %c107_i32_23 dim 1 : vector<1x128xf32>, i32 -> vector<1x128xf32>
    %c23 = arith.constant 23 : index
    %400 = memref.load %arg1[%c23] : memref<96xf32, #tpu.memory_space<smem>>
    %401 = vector.broadcast %400 : f32 to vector<1x128xf32>
    %402 = arith.mulf %401, %399 : vector<1x128xf32>
    %403 = arith.addf %386, %402 : vector<1x128xf32>
    %c47 = arith.constant 47 : index
    %404 = memref.load %arg1[%c47] : memref<96xf32, #tpu.memory_space<smem>>
    %405 = vector.broadcast %404 : f32 to vector<1x128xf32>
    %406 = arith.mulf %405, %399 : vector<1x128xf32>
    %407 = arith.addf %390, %406 : vector<1x128xf32>
    %c71 = arith.constant 71 : index
    %408 = memref.load %arg1[%c71] : memref<96xf32, #tpu.memory_space<smem>>
    %409 = vector.broadcast %408 : f32 to vector<1x128xf32>
    %410 = arith.mulf %409, %399 : vector<1x128xf32>
    %411 = arith.addf %394, %410 : vector<1x128xf32>
    %c95 = arith.constant 95 : index
    %412 = memref.load %arg1[%c95] : memref<96xf32, #tpu.memory_space<smem>>
    %413 = vector.broadcast %412 : f32 to vector<1x128xf32>
    %414 = arith.mulf %413, %399 : vector<1x128xf32>
    %415 = arith.addf %398, %414 : vector<1x128xf32>
    %c0_24 = arith.constant 0 : index
    %c0_25 = arith.constant 0 : index
    %416 = vector.load %arg3[%c0_24, %c0_25] : memref<4x128xf32, #tpu.memory_space<vmem>>, vector<1x128xf32>
    tpu.vector_store %arg3[%c0_24, %c0_25], %403 {strides = array<i32>} : memref<4x128xf32, #tpu.memory_space<vmem>>, vector<1x128xf32>,
    %c1_26 = arith.constant 1 : index
    %c0_27 = arith.constant 0 : index
    %417 = vector.load %arg3[%c1_26, %c0_27] : memref<4x128xf32, #tpu.memory_space<vmem>>, vector<1x128xf32>
    tpu.vector_store %arg3[%c1_26, %c0_27], %407 {strides = array<i32>} : memref<4x128xf32, #tpu.memory_space<vmem>>, vector<1x128xf32>,
    %c2_28 = arith.constant 2 : index
    %c0_29 = arith.constant 0 : index
    %418 = vector.load %arg3[%c2_28, %c0_29] : memref<4x128xf32, #tpu.memory_space<vmem>>, vector<1x128xf32>
    tpu.vector_store %arg3[%c2_28, %c0_29], %411 {strides = array<i32>} : memref<4x128xf32, #tpu.memory_space<vmem>>, vector<1x128xf32>,
    %c3_30 = arith.constant 3 : index
    %c0_31 = arith.constant 0 : index
    %419 = vector.load %arg3[%c3_30, %c0_31] : memref<4x128xf32, #tpu.memory_space<vmem>>, vector<1x128xf32>
    tpu.vector_store %arg3[%c3_30, %c0_31], %415 {strides = array<i32>} : memref<4x128xf32, #tpu.memory_space<vmem>>, vector<1x128xf32>,
    return
  }
}

</mosaic_0001>

<llo_original>
// kernel: model_forward.1
$region0: #{model_forward.1}
  #allocation0 [shape = 'u32[]', space=smem, size = 0x4, offset = 0x4, fixed_abs, tag = 'smem constant byte address 0x4 - core index']
  #allocation1 [shape = 'u32[144,128]{1,0:T(1,128)}', space=vmem, size = 0x12000, scoped, tag = 'internal scratch']
  %s0 = inlined_call_operand.vmem [shape: f32[3,128], index: 0, kind: input, shape index: {}]
  %s1 = inlined_call_operand.vmem [shape: f32[96], index: 1, kind: input, shape index: {}]
  %s2 = inlined_call_operand.vmem [shape: f32[4], index: 2, kind: input, shape index: {}]
  %s3 = inlined_call_operand.vmem [shape: f32[4,128], index: 3, kind: output, shape index: {}]
  %s4 = sld [smem:[#allocation0]]
  $region30: #{model_forward.1} parent=0
    _
  %s6 = ssub.s32 1, %s4
  %s7 = scalar_select 0, %s6, %s4
  $region1: #{model_forward.1} parent=0
    #allocation2 [shape = 'u8[512]{0}', space=smem, size = 0x200, scoped, tag = 'input window, operand 1, single buffered']
    #allocation3 [shape = 's32[1]{0}', space=sflag, size = 0x4, scoped, tag = 'scoped memory for model_forward.1']
    #allocation4 [shape = 'u8[512]{0}', space=smem, size = 0x200, scoped, tag = 'input window, operand 2, single buffered']
    #allocation5 [shape = 's32[1]{0}', space=sflag, size = 0x4, scoped, tag = 'scoped memory for model_forward.1']
    %8 = vsyncpa [#allocation3], 0
    %9 = vsyncpa [#allocation5], 0
    // Predicated region
    $region2: #{model_forward.1} parent=1 // pred_check
      _
    $region3: #{model_forward.1} parent=1 // pred_check_branch
      %11 = sbr.rel (0) target = $region5
    $region4: #{model_forward.1} parent=1 // pred_region
      _
    $region5: #{model_forward.1} parent=1 // pred_fallthru
      _
    // Predicated region
    $region6: #{model_forward.1} parent=1 // pred_check
      _
    $region7: #{model_forward.1} parent=1 // pred_check_branch
      %13 = sbr.rel (0) target = $region9
    $region8: #{model_forward.1} parent=1 // pred_region
      %s15 = ssub.s32 16, 16
      %16 = vsyncadd [#allocation3], %s15
      %s18 = sshll.u32 %s1, 4
      %s19 = int_to_ptr.vmem [resolvable:$true] %s18
      %21 = dma.vmem_to_smem %s19, 16, [#allocation2], [#allocation3]
    $region9: #{model_forward.1} parent=1 // pred_fallthru
      _
    // Predicated region
    $region10: #{model_forward.1} parent=1 // pred_check
      _
    $region11: #{model_forward.1} parent=1 // pred_check_branch
      %23 = sbr.rel (0) target = $region13
    $region12: #{model_forward.1} parent=1 // pred_region
      %s25 = ssub.s32 16, 16
      %26 = vsyncadd [#allocation5], %s25
      %s28 = sshll.u32 %s2, 4
      %s29 = int_to_ptr.vmem [resolvable:$true] %s28
      %31 = dma.vmem_to_smem %s29, 16, [#allocation4], [#allocation5]
    $region13: #{model_forward.1} parent=1 // pred_fallthru
      _
    // Predicated region
    $region14: #{model_forward.1} parent=1 // pred_check
      _
    $region15: #{model_forward.1} parent=1 // pred_check_branch
      %33 = sbr.rel (0) target = $region17
    $region16: #{model_forward.1} parent=1 // pred_region
      %34 = dma.done [#allocation3], 16
    $region17: #{model_forward.1} parent=1 // pred_fallthru
      _
    // Predicated region
    $region18: #{model_forward.1} parent=1 // pred_check
      _
    $region19: #{model_forward.1} parent=1 // pred_check_branch
      %36 = sbr.rel (0) target = $region21
    $region20: #{model_forward.1} parent=1 // pred_region
      %37 = dma.done [#allocation5], 16
    $region21: #{model_forward.1} parent=1 // pred_fallthru
      _
    %38 = sfence
    %v39 = vld [vmem:[%s0] sm:$0x1]
    %v40 = vld [vmem:[%s0 + $0x1] sm:$0x1]
    %v41 = vld [vmem:[%s0 + $0x2] sm:$0x1]
    %s42 = sld [smem:[#allocation4]]
    %v43 = vstv %s42
    %s44 = sld [smem:[#allocation4 + $0x1]]
    %v45 = vstv %s44
    %s46 = sld [smem:[#allocation4 + $0x2]]
    %v47 = vstv %s46
    %s48 = sld [smem:[#allocation4 + $0x3]]
    %v49 = vstv %s48
    %s50 = sld [smem:[#allocation2]]
    %v51 = vstv %s50
    %v52 = vmul.f32 %v51, %v39
    %v53 = vadd.f32 %v43, %v52
    %s54 = sld [smem:[#allocation2 + $0x18]]
    %v55 = vstv %s54
    %v56 = vmul.f32 %v55, %v39
    %v57 = vadd.f32 %v45, %v56
    %s58 = sld [smem:[#allocation2 + $0x30]]
    %v59 = vstv %s58
    %v60 = vmul.f32 %v59, %v39
    %v61 = vadd.f32 %v47, %v60
    %s62 = sld [smem:[#allocation2 + $0x48]]
    %v63 = vstv %s62
    %v64 = vmul.f32 %v63, %v39
    %v65 = vadd.f32 %v49, %v64
    %s66 = sld [smem:[#allocation2 + $0x8]]
    %v67 = vstv %s66
    %v68 = vmul.f32 %v67, %v40
    %v69 = vadd.f32 %v53, %v68
    %s70 = sld [smem:[#allocation2 + $0x20]]
    %v71 = vstv %s70
    %v72 = vmul.f32 %v71, %v40
    %v73 = vadd.f32 %v57, %v72
    %s74 = sld [smem:[#allocation2 + $0x38]]
    %v75 = vstv %s74
    %v76 = vmul.f32 %v75, %v40
    %v77 = vadd.f32 %v61, %v76
    %s78 = sld [smem:[#allocation2 + $0x50]]
    %v79 = vstv %s78
    %v80 = vmul.f32 %v79, %v40
    %v81 = vadd.f32 %v65, %v80
    %s82 = sld [smem:[#allocation2 + $0x10]]
    %v83 = vstv %s82
    %v84 = vmul.f32 %v83, %v41
    %v85 = vadd.f32 %v69, %v84
    %s86 = sld [smem:[#allocation2 + $0x28]]
    %v87 = vstv %s86
    %v88 = vmul.f32 %v87, %v41
    %v89 = vadd.f32 %v73, %v88
    %s90 = sld [smem:[#allocation2 + $0x40]]
    %v91 = vstv %s90
    %v92 = vmul.f32 %v91, %v41
    %v93 = vadd.f32 %v77, %v92
    %s94 = sld [smem:[#allocation2 + $0x58]]
    %v95 = vstv %s94
    %v96 = vmul.f32 %v95, %v41
    %v97 = vadd.f32 %v81, %v96
    %98 = vrot.lane.b32.xlu0 %v39, 127
    %v99 = vpop.permute.xlu0 %98
    %s100 = sld [smem:[#allocation2 + $0x1]]
    %v101 = vstv %s100
    %v102 = vmul.f32 %v101, %v99
    %v103 = vadd.f32 %v85, %v102
    %s104 = sld [smem:[#allocation2 + $0x19]]
    %v105 = vstv %s104
    %v106 = vmul.f32 %v105, %v99
    %v107 = vadd.f32 %v89, %v106
    %s108 = sld [smem:[#allocation2 + $0x31]]
    %v109 = vstv %s108
    %v110 = vmul.f32 %v109, %v99
    %v111 = vadd.f32 %v93, %v110
    %s112 = sld [smem:[#allocation2 + $0x49]]
    %v113 = vstv %s112
    %v114 = vmul.f32 %v113, %v99
    %v115 = vadd.f32 %v97, %v114
    %116 = vrot.lane.b32.xlu0 %v40, 127
    %v117 = vpop.permute.xlu0 %116
    %s118 = sld [smem:[#allocation2 + $0x9]]
    %v119 = vstv %s118
    %v120 = vmul.f32 %v119, %v117
    %v121 = vadd.f32 %v103, %v120
    %s122 = sld [smem:[#allocation2 + $0x21]]
    %v123 = vstv %s122
    %v124 = vmul.f32 %v123, %v117
    %v125 = vadd.f32 %v107, %v124
    %s126 = sld [smem:[#allocation2 + $0x39]]
    %v127 = vstv %s126
    %v128 = vmul.f32 %v127, %v117
    %v129 = vadd.f32 %v111, %v128
    %s130 = sld [smem:[#allocation2 + $0x51]]
    %v131 = vstv %s130
    %v132 = vmul.f32 %v131, %v117
    %v133 = vadd.f32 %v115, %v132
    %134 = vrot.lane.b32.xlu0 %v41, 127
    %v135 = vpop.permute.xlu0 %134
    %s136 = sld [smem:[#allocation2 + $0x11]]
    %v137 = vstv %s136
    %v138 = vmul.f32 %v137, %v135
    %v139 = vadd.f32 %v121, %v138
    %s140 = sld [smem:[#allocation2 + $0x29]]
    %v141 = vstv %s140
    %v142 = vmul.f32 %v141, %v135
    %v143 = vadd.f32 %v125, %v142
    %s144 = sld [smem:[#allocation2 + $0x41]]
    %v145 = vstv %s144
    %v146 = vmul.f32 %v145, %v135
    %v147 = vadd.f32 %v129, %v146
    %s148 = sld [smem:[#allocation2 + $0x59]]
    %v149 = vstv %s148
    %v150 = vmul.f32 %v149, %v135
    %v151 = vadd.f32 %v133, %v150
    %152 = vrot.lane.b32.xlu0 %v39, 124
    %v153 = vpop.permute.xlu0 %152
    %s154 = sld [smem:[#allocation2 + $0x2]]
    %v155 = vstv %s154
    %v156 = vmul.f32 %v155, %v153
    %v157 = vadd.f32 %v139, %v156
    %s158 = sld [smem:[#allocation2 + $0x1a]]
    %v159 = vstv %s158
    %v160 = vmul.f32 %v159, %v153
    %v161 = vadd.f32 %v143, %v160
    %s162 = sld [smem:[#allocation2 + $0x32]]
    %v163 = vstv %s162
    %v164 = vmul.f32 %v163, %v153
    %v165 = vadd.f32 %v147, %v164
    %s166 = sld [smem:[#allocation2 + $0x4a]]
    %v167 = vstv %s166
    %v168 = vmul.f32 %v167, %v153
    %v169 = vadd.f32 %v151, %v168
    %170 = vrot.lane.b32.xlu0 %v40, 124
    %v171 = vpop.permute.xlu0 %170
    %s172 = sld [smem:[#allocation2 + $0xa]]
    %v173 = vstv %s172
    %v174 = vmul.f32 %v173, %v171
    %v175 = vadd.f32 %v157, %v174
    %s176 = sld [smem:[#allocation2 + $0x22]]
    %v177 = vstv %s176
    %v178 = vmul.f32 %v177, %v171
    %v179 = vadd.f32 %v161, %v178
    %s180 = sld [smem:[#allocation2 + $0x3a]]
    %v181 = vstv %s180
    %v182 = vmul.f32 %v181, %v171
    %v183 = vadd.f32 %v165, %v182
    %s184 = sld [smem:[#allocation2 + $0x52]]
    %v185 = vstv %s184
    %v186 = vmul.f32 %v185, %v171
    %v187 = vadd.f32 %v169, %v186
    %188 = vrot.lane.b32.xlu0 %v41, 124
    %v189 = vpop.permute.xlu0 %188
    %s190 = sld [smem:[#allocation2 + $0x12]]
    %v191 = vstv %s190
    %v192 = vmul.f32 %v191, %v189
    %v193 = vadd.f32 %v175, %v192
    %s194 = sld [smem:[#allocation2 + $0x2a]]
    %v195 = vstv %s194
    %v196 = vmul.f32 %v195, %v189
    %v197 = vadd.f32 %v179, %v196
    %s198 = sld [smem:[#allocation2 + $0x42]]
    %v199 = vstv %s198
    %v200 = vmul.f32 %v199, %v189
    %v201 = vadd.f32 %v183, %v200
    %s202 = sld [smem:[#allocation2 + $0x5a]]
    %v203 = vstv %s202
    %v204 = vmul.f32 %v203, %v189
    %v205 = vadd.f32 %v187, %v204
    %206 = vrot.lane.b32.xlu0 %v39, 123
    %v207 = vpop.permute.xlu0 %206
    %s208 = sld [smem:[#allocation2 + $0x3]]
    %v209 = vstv %s208
    %v210 = vmul.f32 %v209, %v207
    %v211 = vadd.f32 %v193, %v210
    %s212 = sld [smem:[#allocation2 + $0x1b]]
    %v213 = vstv %s212
    %v214 = vmul.f32 %v213, %v207
    %v215 = vadd.f32 %v197, %v214
    %s216 = sld [smem:[#allocation2 + $0x33]]
    %v217 = vstv %s216
    %v218 = vmul.f32 %v217, %v207
    %v219 = vadd.f32 %v201, %v218
    %s220 = sld [smem:[#allocation2 + $0x4b]]
    %v221 = vstv %s220
    %v222 = vmul.f32 %v221, %v207
    %v223 = vadd.f32 %v205, %v222
    %224 = vrot.lane.b32.xlu0 %v40, 123
    %v225 = vpop.permute.xlu0 %224
    %s226 = sld [smem:[#allocation2 + $0xb]]
    %v227 = vstv %s226
    %v228 = vmul.f32 %v227, %v225
    %v229 = vadd.f32 %v211, %v228
    %s230 = sld [smem:[#allocation2 + $0x23]]
    %v231 = vstv %s230
    %v232 = vmul.f32 %v231, %v225
    %v233 = vadd.f32 %v215, %v232
    %s234 = sld [smem:[#allocation2 + $0x3b]]
    %v235 = vstv %s234
    %v236 = vmul.f32 %v235, %v225
    %v237 = vadd.f32 %v219, %v236
    %s238 = sld [smem:[#allocation2 + $0x53]]
    %v239 = vstv %s238
    %v240 = vmul.f32 %v239, %v225
    %v241 = vadd.f32 %v223, %v240
    %242 = vrot.lane.b32.xlu0 %v41, 123
    %v243 = vpop.permute.xlu0 %242
    %s244 = sld [smem:[#allocation2 + $0x13]]
    %v245 = vstv %s244
    %v246 = vmul.f32 %v245, %v243
    %v247 = vadd.f32 %v229, %v246
    %s248 = sld [smem:[#allocation2 + $0x2b]]
    %v249 = vstv %s248
    %v250 = vmul.f32 %v249, %v243
    %v251 = vadd.f32 %v233, %v250
    %s252 = sld [smem:[#allocation2 + $0x43]]
    %v253 = vstv %s252
    %v254 = vmul.f32 %v253, %v243
    %v255 = vadd.f32 %v237, %v254
    %s256 = sld [smem:[#allocation2 + $0x5b]]
    %v257 = vstv %s256
    %v258 = vmul.f32 %v257, %v243
    %v259 = vadd.f32 %v241, %v258
    %260 = vrot.lane.b32.xlu0 %v39, 112
    %v261 = vpop.permute.xlu0 %260
    %s262 = sld [smem:[#allocation2 + $0x4]]
    %v263 = vstv %s262
    %v264 = vmul.f32 %v263, %v261
    %v265 = vadd.f32 %v247, %v264
    %s266 = sld [smem:[#allocation2 + $0x1c]]
    %v267 = vstv %s266
    %v268 = vmul.f32 %v267, %v261
    %v269 = vadd.f32 %v251, %v268
    %s270 = sld [smem:[#allocation2 + $0x34]]
    %v271 = vstv %s270
    %v272 = vmul.f32 %v271, %v261
    %v273 = vadd.f32 %v255, %v272
    %s274 = sld [smem:[#allocation2 + $0x4c]]
    %v275 = vstv %s274
    %v276 = vmul.f32 %v275, %v261
    %v277 = vadd.f32 %v259, %v276
    %278 = vrot.lane.b32.xlu0 %v40, 112
    %v279 = vpop.permute.xlu0 %278
    %s280 = sld [smem:[#allocation2 + $0xc]]
    %v281 = vstv %s280
    %v282 = vmul.f32 %v281, %v279
    %v283 = vadd.f32 %v265, %v282
    %s284 = sld [smem:[#allocation2 + $0x24]]
    %v285 = vstv %s284
    %v286 = vmul.f32 %v285, %v279
    %v287 = vadd.f32 %v269, %v286
    %s288 = sld [smem:[#allocation2 + $0x3c]]
    %v289 = vstv %s288
    %v290 = vmul.f32 %v289, %v279
    %v291 = vadd.f32 %v273, %v290
    %s292 = sld [smem:[#allocation2 + $0x54]]
    %v293 = vstv %s292
    %v294 = vmul.f32 %v293, %v279
    %v295 = vadd.f32 %v277, %v294
    %296 = vrot.lane.b32.xlu0 %v41, 112
    %v297 = vpop.permute.xlu0 %296
    %s298 = sld [smem:[#allocation2 + $0x14]]
    %v299 = vstv %s298
    %v300 = vmul.f32 %v299, %v297
    %v301 = vadd.f32 %v283, %v300
    %s302 = sld [smem:[#allocation2 + $0x2c]]
    %v303 = vstv %s302
    %v304 = vmul.f32 %v303, %v297
    %v305 = vadd.f32 %v287, %v304
    %s306 = sld [smem:[#allocation2 + $0x44]]
    %v307 = vstv %s306
    %v308 = vmul.f32 %v307, %v297
    %v309 = vadd.f32 %v291, %v308
    %s310 = sld [smem:[#allocation2 + $0x5c]]
    %v311 = vstv %s310
    %v312 = vmul.f32 %v311, %v297
    %v313 = vadd.f32 %v295, %v312
    %314 = vrot.lane.b32.xlu0 %v39, 111
    %v315 = vpop.permute.xlu0 %314
    %s316 = sld [smem:[#allocation2 + $0x5]]
    %v317 = vstv %s316
    %v318 = vmul.f32 %v317, %v315
    %v319 = vadd.f32 %v301, %v318
    %s320 = sld [smem:[#allocation2 + $0x1d]]
    %v321 = vstv %s320
    %v322 = vmul.f32 %v321, %v315
    %v323 = vadd.f32 %v305, %v322
    %s324 = sld [smem:[#allocation2 + $0x35]]
    %v325 = vstv %s324
    %v326 = vmul.f32 %v325, %v315
    %v327 = vadd.f32 %v309, %v326
    %s328 = sld [smem:[#allocation2 + $0x4d]]
    %v329 = vstv %s328
    %v330 = vmul.f32 %v329, %v315
    %v331 = vadd.f32 %v313, %v330
    %332 = vrot.lane.b32.xlu0 %v40, 111
    %v333 = vpop.permute.xlu0 %332
    %s334 = sld [smem:[#allocation2 + $0xd]]
    %v335 = vstv %s334
    %v336 = vmul.f32 %v335, %v333
    %v337 = vadd.f32 %v319, %v336
    %s338 = sld [smem:[#allocation2 + $0x25]]
    %v339 = vstv %s338
    %v340 = vmul.f32 %v339, %v333
    %v341 = vadd.f32 %v323, %v340
    %s342 = sld [smem:[#allocation2 + $0x3d]]
    %v343 = vstv %s342
    %v344 = vmul.f32 %v343, %v333
    %v345 = vadd.f32 %v327, %v344
    %s346 = sld [smem:[#allocation2 + $0x55]]
    %v347 = vstv %s346
    %v348 = vmul.f32 %v347, %v333
    %v349 = vadd.f32 %v331, %v348
    %350 = vrot.lane.b32.xlu0 %v41, 111
    %v351 = vpop.permute.xlu0 %350
    %s352 = sld [smem:[#allocation2 + $0x15]]
    %v353 = vstv %s352
    %v354 = vmul.f32 %v353, %v351
    %v355 = vadd.f32 %v337, %v354
    %s356 = sld [smem:[#allocation2 + $0x2d]]
    %v357 = vstv %s356
    %v358 = vmul.f32 %v357, %v351
    %v359 = vadd.f32 %v341, %v358
    %s360 = sld [smem:[#allocation2 + $0x45]]
    %v361 = vstv %s360
    %v362 = vmul.f32 %v361, %v351
    %v363 = vadd.f32 %v345, %v362
    %s364 = sld [smem:[#allocation2 + $0x5d]]
    %v365 = vstv %s364
    %v366 = vmul.f32 %v365, %v351
    %v367 = vadd.f32 %v349, %v366
    %368 = vrot.lane.b32.xlu0 %v39, 108
    %v369 = vpop.permute.xlu0 %368
    %s370 = sld [smem:[#allocation2 + $0x6]]
    %v371 = vstv %s370
    %v372 = vmul.f32 %v371, %v369
    %v373 = vadd.f32 %v355, %v372
    %s374 = sld [smem:[#allocation2 + $0x1e]]
    %v375 = vstv %s374
    %v376 = vmul.f32 %v375, %v369
    %v377 = vadd.f32 %v359, %v376
    %s378 = sld [smem:[#allocation2 + $0x36]]
    %v379 = vstv %s378
    %v380 = vmul.f32 %v379, %v369
    %v381 = vadd.f32 %v363, %v380
    %s382 = sld [smem:[#allocation2 + $0x4e]]
    %v383 = vstv %s382
    %v384 = vmul.f32 %v383, %v369
    %v385 = vadd.f32 %v367, %v384
    %386 = vrot.lane.b32.xlu0 %v40, 108
    %v387 = vpop.permute.xlu0 %386
    %s388 = sld [smem:[#allocation2 + $0xe]]
    %v389 = vstv %s388
    %v390 = vmul.f32 %v389, %v387
    %v391 = vadd.f32 %v373, %v390
    %s392 = sld [smem:[#allocation2 + $0x26]]
    %v393 = vstv %s392
    %v394 = vmul.f32 %v393, %v387
    %v395 = vadd.f32 %v377, %v394
    %s396 = sld [smem:[#allocation2 + $0x3e]]
    %v397 = vstv %s396
    %v398 = vmul.f32 %v397, %v387
    %v399 = vadd.f32 %v381, %v398
    %s400 = sld [smem:[#allocation2 + $0x56]]
    %v401 = vstv %s400
    %v402 = vmul.f32 %v401, %v387
    %v403 = vadd.f32 %v385, %v402
    %404 = vrot.lane.b32.xlu0 %v41, 108
    %v405 = vpop.permute.xlu0 %404
    %s406 = sld [smem:[#allocation2 + $0x16]]
    %v407 = vstv %s406
    %v408 = vmul.f32 %v407, %v405
    %v409 = vadd.f32 %v391, %v408
    %s410 = sld [smem:[#allocation2 + $0x2e]]
    %v411 = vstv %s410
    %v412 = vmul.f32 %v411, %v405
    %v413 = vadd.f32 %v395, %v412
    %s414 = sld [smem:[#allocation2 + $0x46]]
    %v415 = vstv %s414
    %v416 = vmul.f32 %v415, %v405
    %v417 = vadd.f32 %v399, %v416
    %s418 = sld [smem:[#allocation2 + $0x5e]]
    %v419 = vstv %s418
    %v420 = vmul.f32 %v419, %v405
    %v421 = vadd.f32 %v403, %v420
    %422 = vrot.lane.b32.xlu0 %v39, 107
    %v423 = vpop.permute.xlu0 %422
    %s424 = sld [smem:[#allocation2 + $0x7]]
    %v425 = vstv %s424
    %v426 = vmul.f32 %v425, %v423
    %v427 = vadd.f32 %v409, %v426
    %s428 = sld [smem:[#allocation2 + $0x1f]]
    %v429 = vstv %s428
    %v430 = vmul.f32 %v429, %v423
    %v431 = vadd.f32 %v413, %v430
    %s432 = sld [smem:[#allocation2 + $0x37]]
    %v433 = vstv %s432
    %v434 = vmul.f32 %v433, %v423
    %v435 = vadd.f32 %v417, %v434
    %s436 = sld [smem:[#allocation2 + $0x4f]]
    %v437 = vstv %s436
    %v438 = vmul.f32 %v437, %v423
    %v439 = vadd.f32 %v421, %v438
    %440 = vrot.lane.b32.xlu0 %v40, 107
    %v441 = vpop.permute.xlu0 %440
    %s442 = sld [smem:[#allocation2 + $0xf]]
    %v443 = vstv %s442
    %v444 = vmul.f32 %v443, %v441
    %v445 = vadd.f32 %v427, %v444
    %s446 = sld [smem:[#allocation2 + $0x27]]
    %v447 = vstv %s446
    %v448 = vmul.f32 %v447, %v441
    %v449 = vadd.f32 %v431, %v448
    %s450 = sld [smem:[#allocation2 + $0x3f]]
    %v451 = vstv %s450
    %v452 = vmul.f32 %v451, %v441
    %v453 = vadd.f32 %v435, %v452
    %s454 = sld [smem:[#allocation2 + $0x57]]
    %v455 = vstv %s454
    %v456 = vmul.f32 %v455, %v441
    %v457 = vadd.f32 %v439, %v456
    %458 = vrot.lane.b32.xlu0 %v41, 107
    %v459 = vpop.permute.xlu0 %458
    %s460 = sld [smem:[#allocation2 + $0x17]]
    %v461 = vstv %s460
    %v462 = vmul.f32 %v461, %v459
    %v463 = vadd.f32 %v445, %v462
    %s464 = sld [smem:[#allocation2 + $0x2f]]
    %v465 = vstv %s464
    %v466 = vmul.f32 %v465, %v459
    %v467 = vadd.f32 %v449, %v466
    %s468 = sld [smem:[#allocation2 + $0x47]]
    %v469 = vstv %s468
    %v470 = vmul.f32 %v469, %v459
    %v471 = vadd.f32 %v453, %v470
    %s472 = sld [smem:[#allocation2 + $0x5f]]
    %v473 = vstv %s472
    %v474 = vmul.f32 %v473, %v459
    %v475 = vadd.f32 %v457, %v474
    %476 = vst [vmem:[%s3] sm:$0x1] %v463
    %477 = vst [vmem:[%s3 + $0x1] sm:$0x1] %v467
    %478 = vst [vmem:[%s3 + $0x2] sm:$0x1] %v471
    %479 = vst [vmem:[%s3 + $0x3] sm:$0x1] %v475
    // Predicated region
    $region22: #{model_forward.1} parent=1 // pred_check
      _
    $region23: #{model_forward.1} parent=1 // pred_check_branch
      %481 = sbr.rel (0) target = $region25
    $region24: #{model_forward.1} parent=1 // pred_region
      _
    $region25: #{model_forward.1} parent=1 // pred_fallthru
      _
    // Predicated region
    $region26: #{model_forward.1} parent=1 // pred_check
      _
    $region27: #{model_forward.1} parent=1 // pred_check_branch
      %483 = sbr.rel (0) target = $region29
    $region28: #{model_forward.1} parent=1 // pred_region
      _
    $region29: #{model_forward.1} parent=1 // pred_fallthru
      _
    %484 = vsyncpa [#allocation3], 1
    %485 = vsyncpa [#allocation5], 1

</llo_original>
